<compile_context>
chip_gen: v5e
topology: v5e:2x2
jax: 0.10.0
libtpu: 0.0.40
codegen_flags: <defaults>
</compile_context>

<pallas_src>
import functools

import jax
import jax.numpy as jnp
from jax.experimental import pallas as pl
from jax.experimental.pallas import tpu as pltpu


def _round_up(x, m):
    return (x + m - 1) // m * m


# ----------------------------- Fused Pallas kernel -------------------------

def decoder_step_kernel(num_layers, hidden_size,
                        tok_ref, h_ref, c_ref, emb_ref, *rest):
    """Fused decode step: embedding gather + stacked LSTM cells + fc.

    Inputs (VMEM):
      tok_ref : (N, 1)  int32 token ids
      h_ref   : (L, N, H) float32 previous hidden
      c_ref   : (L, N, H) float32 previous cell
      emb_ref : (V, E)  bfloat16 embedding table
      rest    : per-layer [w (in+H, 4H) bf16, b (1, 4H) f32] * L,
                fc_w (H, V_pad) bf16, fc_b (1, V_pad) f32,
                then outputs: preds (N, V_pad) f32, h_out (L, N, H), c_out (L, N, H)
    Gate column order in all LSTM weights/biases is [i | f | o | g].
    """
    n_lw = 2 * num_layers
    layer_refs = rest[:n_lw]
    fc_w_ref = rest[n_lw]
    fc_b_ref = rest[n_lw + 1]
    preds_ref, h_out_ref, c_out_ref = rest[n_lw + 2:]

    H = hidden_size
    N, _ = tok_ref.shape
    V_in = emb_ref.shape[0]

    # --- Embedding lookup as a one-hot matmul on the MXU (table stays in VMEM).
    tok = tok_ref[...]                                              # (N, 1) int32
    iota = jax.lax.broadcasted_iota(jnp.int32, (N, V_in), 1)
    one_hot = (tok == iota).astype(emb_ref.dtype)                   # (N, V) bf16
    x = jnp.dot(one_hot, emb_ref[...],
                preferred_element_type=jnp.float32)                 # (N, E) f32
    # TODO(synk): dropout == identity here (see header note).

    # --- Stacked LSTM cells, unrolled at trace time; state never leaves VMEM.
    for layer in range(num_layers):
        w_ref = layer_refs[2 * layer]        # (in_dim + H, 4H) bf16
        b_ref = layer_refs[2 * layer + 1]    # (1, 4H) f32
        h_prev = h_ref[layer]                # (N, H) f32
        c_prev = c_ref[layer]                # (N, H) f32

        # One MXU matmul per layer: [x | h] @ [W_ih^T ; W_hh^T]
        xh = jnp.concatenate([x, h_prev], axis=-1).astype(w_ref.dtype)
        gates = (jnp.dot(xh, w_ref[...], preferred_element_type=jnp.float32)
                 + b_ref[...])                                      # (N, 4H) f32

        sig = jax.nn.sigmoid(gates[:, :3 * H])   # one EUP pass over [i|f|o]
        g_g = jnp.tanh(gates[:, 3 * H:])         # one EUP pass over g
        i_g = sig[:, 0 * H:1 * H]
        f_g = sig[:, 1 * H:2 * H]
        o_g = sig[:, 2 * H:3 * H]

        c_new = f_g * c_prev + i_g * g_g
        h_new = o_g * jnp.tanh(c_new)

        h_out_ref[layer] = h_new
        c_out_ref[layer] = c_new
        x = h_new

    # --- Final projection; V is pre-padded to a lane-dense multiple of 128.
    preds_ref[...] = (jnp.dot(x.astype(fc_w_ref.dtype), fc_w_ref[...],
                              preferred_element_type=jnp.float32)
                      + fc_b_ref[...])


# ----------------------------- Parameters ----------------------------------

def init_decoder_params(key, input_size, embedding_size, hidden_size,
                        output_size, num_layers):
    """Synthetic params matching nn.Embedding / nn.LSTM / nn.Linear, pre-laid-out
    for the fused kernel (concatenated & gate-reordered LSTM weights, padded fc)."""
    H = hidden_size
    V_pad = _round_up(output_size, 128)
    params = {"output_size": output_size}

    keys = jax.random.split(key, 3 + 4 * num_layers)
    kidx = 0

    # nn.Embedding(input_size, embedding_size) -> bf16 table for the MXU gather.
    emb = jax.random.normal(keys[kidx], (input_size, embedding_size),
                            jnp.float32) * 0.1
    params["embedding"] = emb.astype(jnp.bfloat16)
    kidx += 1

    def reorder_gates(w):
        # PyTorch gate order [i|f|g|o] along last axis -> [i|f|o|g] so a single
        # sigmoid covers a contiguous 3H block in-kernel.
        i_b = w[..., 0 * H:1 * H]
        f_b = w[..., 1 * H:2 * H]
        g_b = w[..., 2 * H:3 * H]
        o_b = w[..., 3 * H:4 * H]
        return jnp.concatenate([i_b, f_b, o_b, g_b], axis=-1)

    # nn.LSTM(embedding_size, hidden_size, num_layers)
    for layer in range(num_layers):
        in_dim = embedding_size if layer == 0 else hidden_size
        scale = 1.0 / jnp.sqrt(hidden_size)
        w_ih = jax.random.uniform(keys[kidx], (4 * H, in_dim),
                                  jnp.float32, -scale, scale); kidx += 1
        w_hh = jax.random.uniform(keys[kidx], (4 * H, H),
                                  jnp.float32, -scale, scale); kidx += 1
        b_ih = jax.random.uniform(keys[kidx], (4 * H,),
                                  jnp.float32, -scale, scale); kidx += 1
        b_hh = jax.random.uniform(keys[kidx], (4 * H,),
                                  jnp.float32, -scale, scale); kidx += 1
        w_cat = jnp.concatenate([w_ih.T, w_hh.T], axis=0)        # (in_dim+H, 4H)
        params[f"w{layer}"] = reorder_gates(w_cat).astype(jnp.bfloat16)
        params[f"b{layer}"] = reorder_gates((b_ih + b_hh)[None, :])  # (1, 4H) f32

    # nn.Linear(hidden_size, output_size), padded to lane-dense V_pad.
    scale = 1.0 / jnp.sqrt(hidden_size)
    fc_w = jax.random.uniform(keys[kidx], (output_size, H),
                              jnp.float32, -scale, scale)
    fc_b = jax.random.uniform(keys[kidx + 1], (output_size,),
                              jnp.float32, -scale, scale)
    fc_w_t = jnp.zeros((H, V_pad), jnp.float32).at[:, :output_size].set(fc_w.T)
    fc_b_p = jnp.zeros((1, V_pad), jnp.float32).at[:, :output_size].set(fc_b)
    params["fc_w_t"] = fc_w_t.astype(jnp.bfloat16)
    params["fc_b"] = fc_b_p
    return params


# ----------------------------- Wrapper --------------------------------------

def decoder_forward(params, x_tokens, hidden, cell, num_layers):
    """Mirrors Decoder.forward for one decode step.

    x_tokens: (N,) int32; hidden/cell: (num_layers, N, H) float32.
    Returns (predictions (N, V), hidden, cell).
    """
    N = x_tokens.shape[0]
    L, _, H = hidden.shape
    V = params["output_size"]
    V_pad = params["fc_w_t"].shape[-1]

    tok = x_tokens.reshape(N, 1).astype(jnp.int32)

    inputs = [tok, hidden, cell, params["embedding"]]
    for layer in range(num_layers):
        inputs.append(params[f"w{layer}"])
        inputs.append(params[f"b{layer}"])
    inputs.append(params["fc_w_t"])
    inputs.append(params["fc_b"])

    vmem = pl.BlockSpec(memory_space=pltpu.MemorySpace.VMEM)
    preds_pad, h_out, c_out = pl.pallas_call(
        functools.partial(decoder_step_kernel, num_layers, H),
        out_shape=(
            jax.ShapeDtypeStruct((N, V_pad), jnp.float32),
            jax.ShapeDtypeStruct((L, N, H), jnp.float32),
            jax.ShapeDtypeStruct((L, N, H), jnp.float32),
        ),
        in_specs=[vmem] * len(inputs),
        out_specs=(vmem, vmem, vmem),
        # hidden -> new hidden, cell -> new cell written in place (HBM-aliased).
        input_output_aliases={1: 1, 2: 2},
    )(*inputs)

    return preds_pad[:, :V], h_out, c_out


# ----------------------------- Main ----------------------------------------

if __name__ == "__main__":
    INPUT_SIZE = 64        # decoder vocab (input_size == output_size)
    OUTPUT_SIZE = 64
    EMBEDDING_SIZE = 32
    HIDDEN_SIZE = 32       # 4H = 128 -> one full vreg of gates per batch row
    NUM_LAYERS = 2
    BATCH = 8

    key = jax.random.PRNGKey(0)
    k_params, k_tok, k_h, k_c = jax.random.split(key, 4)

    params = init_decoder_params(k_params, INPUT_SIZE, EMBEDDING_SIZE,
                                 HIDDEN_SIZE, OUTPUT_SIZE, NUM_LAYERS)

    x_tokens = jax.random.randint(k_tok, (BATCH,), 0, INPUT_SIZE, jnp.int32)
    hidden = jax.random.normal(k_h, (NUM_LAYERS, BATCH, HIDDEN_SIZE), jnp.float32)
    cell = jax.random.normal(k_c, (NUM_LAYERS, BATCH, HIDDEN_SIZE), jnp.float32)

    preds, h_out, c_out = decoder_forward(params, x_tokens, hidden, cell,
                                          NUM_LAYERS)
    jax.block_until_ready((preds, h_out, c_out))

    assert preds.shape == (BATCH, OUTPUT_SIZE)
    assert h_out.shape == (NUM_LAYERS, BATCH, HIDDEN_SIZE)
    assert c_out.shape == (NUM_LAYERS, BATCH, HIDDEN_SIZE)
    print("KERNEL_OK")
</pallas_src>

<mosaic_0001>
module attributes {stable_mosaic.version = 11 : i64} {
  func.func @decoder_step_kernel(%arg0: memref<8x1xi32, #tpu.memory_space<vmem>>, %arg1: memref<2x8x32xf32, #tpu.memory_space<vmem>>, %arg2: memref<2x8x32xf32, #tpu.memory_space<vmem>>, %arg3: memref<64x32xbf16, #tpu.memory_space<vmem>>, %arg4: memref<64x128xbf16, #tpu.memory_space<vmem>>, %arg5: memref<1x128xf32, #tpu.memory_space<vmem>>, %arg6: memref<64x128xbf16, #tpu.memory_space<vmem>>, %arg7: memref<1x128xf32, #tpu.memory_space<vmem>>, %arg8: memref<32x128xbf16, #tpu.memory_space<vmem>>, %arg9: memref<1x128xf32, #tpu.memory_space<vmem>>, %arg10: memref<8x128xf32, #tpu.memory_space<vmem>>, %arg11: memref<2x8x32xf32, #tpu.memory_space<vmem>>, %arg12: memref<2x8x32xf32, #tpu.memory_space<vmem>>) attributes {dimension_semantics = [], scalar_prefetch = 0 : i64, scratch_operands = 0 : i64, tpu.core_type = #tpu.core_type<tc>} {
    %c0 = arith.constant 0 : index
    %c0_0 = arith.constant 0 : index
    %0 = vector.load %arg0[%c0, %c0_0] : memref<8x1xi32, #tpu.memory_space<vmem>>, vector<8x1xi32>
    %1 = tpu.iota {dimensions = array<i32: 1>} : vector<8x64xi32>
    %2 = vector.broadcast %0 : vector<8x1xi32> to vector<8x64xi32>
    %3 = arith.cmpi eq, %2, %1 : vector<8x64xi32>
    %4 = arith.extui %3 : vector<8x64xi1> to vector<8x64xi32>
    %5 = arith.sitofp %4 : vector<8x64xi32> to vector<8x64xf32>
    %6 = arith.truncf %5 : vector<8x64xf32> to vector<8x64xbf16>
    %c0_1 = arith.constant 0 : index
    %c0_2 = arith.constant 0 : index
    %7 = vector.load %arg3[%c0_1, %c0_2] : memref<64x32xbf16, #tpu.memory_space<vmem>>, vector<64x32xbf16>
    %cst = arith.constant dense<0.000000e+00> : vector<8x32xf32>
    %8 = tpu.matmul %6, %7, %cst {dimension_numbers = #tpu.dot_dimension_numbers<[1], [0], [0], [1], [0, 0, 1, 1], [], []>} : vector<8x64xbf16>, vector<64x32xbf16>, vector<8x32xf32> -> vector<8x32xf32>
    %c0_3 = arith.constant 0 : index
    %c0_4 = arith.constant 0 : index
    %c0_5 = arith.constant 0 : index
    %9 = vector.load %arg1[%c0_3, %c0_4, %c0_5] : memref<2x8x32xf32, #tpu.memory_space<vmem>>, vector<1x8x32xf32>
    %10 = vector.shape_cast %9 : vector<1x8x32xf32> to vector<8x32xf32>
    %c0_6 = arith.constant 0 : index
    %c0_7 = arith.constant 0 : index
    %c0_8 = arith.constant 0 : index
    %11 = vector.load %arg2[%c0_6, %c0_7, %c0_8] : memref<2x8x32xf32, #tpu.memory_space<vmem>>, vector<1x8x32xf32>
    %12 = vector.shape_cast %11 : vector<1x8x32xf32> to vector<8x32xf32>
    %13 = tpu.concatenate %8, %10 in 1 : vector<8x32xf32>, vector<8x32xf32> -> vector<8x64xf32>
    %14 = arith.truncf %13 : vector<8x64xf32> to vector<8x64xbf16>
    %c0_9 = arith.constant 0 : index
    %c0_10 = arith.constant 0 : index
    %15 = vector.load %arg4[%c0_9, %c0_10] : memref<64x128xbf16, #tpu.memory_space<vmem>>, vector<64x128xbf16>
    %cst_11 = arith.constant dense<0.000000e+00> : vector<8x128xf32>
    %16 = tpu.matmul %14, %15, %cst_11 {dimension_numbers = #tpu.dot_dimension_numbers<[1], [0], [0], [1], [0, 0, 1, 1], [], []>} : vector<8x64xbf16>, vector<64x128xbf16>, vector<8x128xf32> -> vector<8x128xf32>
    %c0_12 = arith.constant 0 : index
    %c0_13 = arith.constant 0 : index
    %17 = vector.load %arg5[%c0_12, %c0_13] : memref<1x128xf32, #tpu.memory_space<vmem>>, vector<1x128xf32>
    %18 = vector.broadcast %17 : vector<1x128xf32> to vector<8x128xf32>
    %19 = arith.addf %16, %18 : vector<8x128xf32>
    %20 = vector.extract_strided_slice %19 {offsets = [0, 0], sizes = [8, 96], strides = [1, 1]} : vector<8x128xf32> to vector<8x96xf32>
    %21 = arith.negf %20 : vector<8x96xf32>
    %22 = math.exp %21 : vector<8x96xf32>
    %cst_14 = arith.constant 1.000000e+00 : f32
    %23 = vector.broadcast %cst_14 : f32 to vector<8x96xf32>
    %24 = arith.addf %23, %22 : vector<8x96xf32>
    %25 = arith.divf %23, %24 : vector<8x96xf32>
    %26 = vector.extract_strided_slice %19 {offsets = [0, 96], sizes = [8, 32], strides = [1, 1]} : vector<8x128xf32> to vector<8x32xf32>
    %27 = math.tanh %26 : vector<8x32xf32>
    %28 = vector.extract_strided_slice %25 {offsets = [0, 0], sizes = [8, 32], strides = [1, 1]} : vector<8x96xf32> to vector<8x32xf32>
    %29 = vector.extract_strided_slice %25 {offsets = [0, 32], sizes = [8, 32], strides = [1, 1]} : vector<8x96xf32> to vector<8x32xf32>
    %30 = vector.extract_strided_slice %25 {offsets = [0, 64], sizes = [8, 32], strides = [1, 1]} : vector<8x96xf32> to vector<8x32xf32>
    %31 = arith.mulf %29, %12 : vector<8x32xf32>
    %32 = arith.mulf %28, %27 : vector<8x32xf32>
    %33 = arith.addf %31, %32 : vector<8x32xf32>
    %34 = math.tanh %33 : vector<8x32xf32>
    %35 = arith.mulf %30, %34 : vector<8x32xf32>
    %c0_15 = arith.constant 0 : index
    %c0_16 = arith.constant 0 : index
    %c0_17 = arith.constant 0 : index
    %36 = vector.load %arg11[%c0_15, %c0_16, %c0_17] : memref<2x8x32xf32, #tpu.memory_space<vmem>>, vector<1x8x32xf32>
    %37 = vector.shape_cast %36 : vector<1x8x32xf32> to vector<8x32xf32>
    %38 = vector.shape_cast %35 : vector<8x32xf32> to vector<1x8x32xf32>
    tpu.vector_store %arg11[%c0_15, %c0_16, %c0_17], %38 {strides = array<i32>} : memref<2x8x32xf32, #tpu.memory_space<vmem>>, vector<1x8x32xf32>,
    %c0_18 = arith.constant 0 : index
    %c0_19 = arith.constant 0 : index
    %c0_20 = arith.constant 0 : index
    %39 = vector.load %arg12[%c0_18, %c0_19, %c0_20] : memref<2x8x32xf32, #tpu.memory_space<vmem>>, vector<1x8x32xf32>
    %40 = vector.shape_cast %39 : vector<1x8x32xf32> to vector<8x32xf32>
    %41 = vector.shape_cast %33 : vector<8x32xf32> to vector<1x8x32xf32>
    tpu.vector_store %arg12[%c0_18, %c0_19, %c0_20], %41 {strides = array<i32>} : memref<2x8x32xf32, #tpu.memory_space<vmem>>, vector<1x8x32xf32>,
    %c1 = arith.constant 1 : index
    %c0_21 = arith.constant 0 : index
    %c0_22 = arith.constant 0 : index
    %42 = vector.load %arg1[%c1, %c0_21, %c0_22] : memref<2x8x32xf32, #tpu.memory_space<vmem>>, vector<1x8x32xf32>
    %43 = vector.shape_cast %42 : vector<1x8x32xf32> to vector<8x32xf32>
    %c1_23 = arith.constant 1 : index
    %c0_24 = arith.constant 0 : index
    %c0_25 = arith.constant 0 : index
    %44 = vector.load %arg2[%c1_23, %c0_24, %c0_25] : memref<2x8x32xf32, #tpu.memory_space<vmem>>, vector<1x8x32xf32>
    %45 = vector.shape_cast %44 : vector<1x8x32xf32> to vector<8x32xf32>
    %46 = tpu.concatenate %35, %43 in 1 : vector<8x32xf32>, vector<8x32xf32> -> vector<8x64xf32>
    %47 = arith.truncf %46 : vector<8x64xf32> to vector<8x64xbf16>
    %c0_26 = arith.constant 0 : index
    %c0_27 = arith.constant 0 : index
    %48 = vector.load %arg6[%c0_26, %c0_27] : memref<64x128xbf16, #tpu.memory_space<vmem>>, vector<64x128xbf16>
    %cst_28 = arith.constant dense<0.000000e+00> : vector<8x128xf32>
    %49 = tpu.matmul %47, %48, %cst_28 {dimension_numbers = #tpu.dot_dimension_numbers<[1], [0], [0], [1], [0, 0, 1, 1], [], []>} : vector<8x64xbf16>, vector<64x128xbf16>, vector<8x128xf32> -> vector<8x128xf32>
    %c0_29 = arith.constant 0 : index
    %c0_30 = arith.constant 0 : index
    %50 = vector.load %arg7[%c0_29, %c0_30] : memref<1x128xf32, #tpu.memory_space<vmem>>, vector<1x128xf32>
    %51 = vector.broadcast %50 : vector<1x128xf32> to vector<8x128xf32>
    %52 = arith.addf %49, %51 : vector<8x128xf32>
    %53 = vector.extract_strided_slice %52 {offsets = [0, 0], sizes = [8, 96], strides = [1, 1]} : vector<8x128xf32> to vector<8x96xf32>
    %54 = arith.negf %53 : vector<8x96xf32>
    %55 = math.exp %54 : vector<8x96xf32>
    %cst_31 = arith.constant 1.000000e+00 : f32
    %56 = vector.broadcast %cst_31 : f32 to vector<8x96xf32>
    %57 = arith.addf %56, %55 : vector<8x96xf32>
    %58 = arith.divf %56, %57 : vector<8x96xf32>
    %59 = vector.extract_strided_slice %52 {offsets = [0, 96], sizes = [8, 32], strides = [1, 1]} : vector<8x128xf32> to vector<8x32xf32>
    %60 = math.tanh %59 : vector<8x32xf32>
    %61 = vector.extract_strided_slice %58 {offsets = [0, 0], sizes = [8, 32], strides = [1, 1]} : vector<8x96xf32> to vector<8x32xf32>
    %62 = vector.extract_strided_slice %58 {offsets = [0, 32], sizes = [8, 32], strides = [1, 1]} : vector<8x96xf32> to vector<8x32xf32>
    %63 = vector.extract_strided_slice %58 {offsets = [0, 64], sizes = [8, 32], strides = [1, 1]} : vector<8x96xf32> to vector<8x32xf32>
    %64 = arith.mulf %62, %45 : vector<8x32xf32>
    %65 = arith.mulf %61, %60 : vector<8x32xf32>
    %66 = arith.addf %64, %65 : vector<8x32xf32>
    %67 = math.tanh %66 : vector<8x32xf32>
    %68 = arith.mulf %63, %67 : vector<8x32xf32>
    %c1_32 = arith.constant 1 : index
    %c0_33 = arith.constant 0 : index
    %c0_34 = arith.constant 0 : index
    %69 = vector.load %arg11[%c1_32, %c0_33, %c0_34] : memref<2x8x32xf32, #tpu.memory_space<vmem>>, vector<1x8x32xf32>
    %70 = vector.shape_cast %69 : vector<1x8x32xf32> to vector<8x32xf32>
    %71 = vector.shape_cast %68 : vector<8x32xf32> to vector<1x8x32xf32>
    tpu.vector_store %arg11[%c1_32, %c0_33, %c0_34], %71 {strides = array<i32>} : memref<2x8x32xf32, #tpu.memory_space<vmem>>, vector<1x8x32xf32>,
    %c1_35 = arith.constant 1 : index
    %c0_36 = arith.constant 0 : index
    %c0_37 = arith.constant 0 : index
    %72 = vector.load %arg12[%c1_35, %c0_36, %c0_37] : memref<2x8x32xf32, #tpu.memory_space<vmem>>, vector<1x8x32xf32>
    %73 = vector.shape_cast %72 : vector<1x8x32xf32> to vector<8x32xf32>
    %74 = vector.shape_cast %66 : vector<8x32xf32> to vector<1x8x32xf32>
    tpu.vector_store %arg12[%c1_35, %c0_36, %c0_37], %74 {strides = array<i32>} : memref<2x8x32xf32, #tpu.memory_space<vmem>>, vector<1x8x32xf32>,
    %75 = arith.truncf %68 : vector<8x32xf32> to vector<8x32xbf16>
    %c0_38 = arith.constant 0 : index
    %c0_39 = arith.constant 0 : index
    %76 = vector.load %arg8[%c0_38, %c0_39] : memref<32x128xbf16, #tpu.memory_space<vmem>>, vector<32x128xbf16>
    %cst_40 = arith.constant dense<0.000000e+00> : vector<8x128xf32>
    %77 = tpu.matmul %75, %76, %cst_40 {dimension_numbers = #tpu.dot_dimension_numbers<[1], [0], [0], [1], [0, 0, 1, 1], [], []>} : vector<8x32xbf16>, vector<32x128xbf16>, vector<8x128xf32> -> vector<8x128xf32>
    %c0_41 = arith.constant 0 : index
    %c0_42 = arith.constant 0 : index
    %78 = vector.load %arg9[%c0_41, %c0_42] : memref<1x128xf32, #tpu.memory_space<vmem>>, vector<1x128xf32>
    %79 = vector.broadcast %78 : vector<1x128xf32> to vector<8x128xf32>
    %80 = arith.addf %77, %79 : vector<8x128xf32>
    %c0_43 = arith.constant 0 : index
    %c0_44 = arith.constant 0 : index
    %81 = vector.load %arg10[%c0_43, %c0_44] : memref<8x128xf32, #tpu.memory_space<vmem>>, vector<8x128xf32>
    tpu.vector_store %arg10[%c0_43, %c0_44], %80 {strides = array<i32>} : memref<8x128xf32, #tpu.memory_space<vmem>>, vector<8x128xf32>,
    return
  }
}

</mosaic_0001>

<llo_original>
// kernel: tpu_custom_call.1
$region0: #{tpu_custom_call.1}
  #allocation0 [shape = 'u32[]', space=smem, size = 0x4, offset = 0x4, fixed_abs, tag = 'smem constant byte address 0x4 - core index']
  #allocation1 [shape = 'u32[72,128]{1,0:T(1,128)}', space=vmem, size = 0x9000, scoped, tag = 'internal scratch']
  %s0 = inlined_call_operand.vmem [shape: s32[8,1], index: 0, kind: input, shape index: {}]
  %s1 = inlined_call_operand.hbm [shape: f32[2,8,32], index: 1, kind: input, shape index: {}, may-alias: {1,11}]
  %s2 = inlined_call_operand.hbm [shape: f32[2,8,32], index: 2, kind: input, shape index: {}, may-alias: {2,12}]
  %s3 = inlined_call_operand.vmem [shape: bf16[64,32], index: 3, kind: input, shape index: {}]
  %s4 = inlined_call_operand.vmem [shape: bf16[64,128], index: 4, kind: input, shape index: {}]
  %s5 = inlined_call_operand.vmem [shape: f32[1,128], index: 5, kind: input, shape index: {}]
  %s6 = inlined_call_operand.vmem [shape: bf16[64,128], index: 6, kind: input, shape index: {}]
  %s7 = inlined_call_operand.vmem [shape: f32[1,128], index: 7, kind: input, shape index: {}]
  %s8 = inlined_call_operand.vmem [shape: bf16[32,128], index: 8, kind: input, shape index: {}]
  %s9 = inlined_call_operand.vmem [shape: f32[1,128], index: 9, kind: input, shape index: {}]
  %s10 = inlined_call_operand.hbm [shape: f32[8,128], index: 10, kind: output, shape index: {0}]
  %s11 = inlined_call_operand.hbm [shape: f32[2,8,32], index: 11, kind: output, shape index: {1}, may-alias: {1,11}]
  %s12 = inlined_call_operand.hbm [shape: f32[2,8,32], index: 12, kind: output, shape index: {2}, may-alias: {2,12}]
  %13 = xla_tuple %s10, %s11, %s12
  %s14 = sld [smem:[#allocation0]]
  $region74: #{tpu_custom_call.1} parent=0
    _
  %s16 = ssub.s32 1, %s14
  %s17 = scalar_select 0, %s16, %s14
  $region1: #{tpu_custom_call.1} parent=0
    #allocation2 [shape = 'u8[8192]{0}', space=vmem, size = 0x2000, scoped, tag = 'input window, operand 1, single buffered']
    #allocation3 [shape = 's32[1]{0}', space=sflag, size = 0x4, scoped, tag = 'scoped memory for tpu_custom_call.1']
    #allocation4 [shape = 's32[1]{0}', space=sflag, size = 0x4, scoped, tag = 'scoped memory for tpu_custom_call.1']
    #allocation5 [shape = 'u8[8192]{0}', space=vmem, size = 0x2000, scoped, tag = 'input window, operand 2, single buffered']
    #allocation6 [shape = 's32[1]{0}', space=sflag, size = 0x4, scoped, tag = 'scoped memory for tpu_custom_call.1']
    #allocation7 [shape = 'u8[4096]{0}', space=vmem, size = 0x1000, scoped, tag = 'output window, operand 0, single buffered']
    #allocation8 [shape = 'u8[8192]{0}', space=vmem, size = 0x2000, scoped, tag = 'output window, operand 1, single buffered']
    #allocation9 [shape = 's32[1]{0}', space=sflag, size = 0x4, scoped, tag = 'scoped memory for tpu_custom_call.1']
    #allocation10 [shape = 'u8[8192]{0}', space=vmem, size = 0x2000, scoped, tag = 'output window, operand 2, single buffered']
    %18 = vsyncpa [#allocation3], 0
    %19 = vsyncpa [#allocation6], 0
    %20 = vsyncpa [#allocation4], 0
    %21 = vsyncpa [#allocation9], 0
    // Predicated region
    $region2: #{tpu_custom_call.1} parent=1 // pred_check
      _
    $region3: #{tpu_custom_call.1} parent=1 // pred_check_branch
      %23 = sbr.rel (0) target = $region5
    $region4: #{tpu_custom_call.1} parent=1 // pred_region
      _
    $region5: #{tpu_custom_call.1} parent=1 // pred_fallthru
      _
    // Predicated region
    $region6: #{tpu_custom_call.1} parent=1 // pred_check
      _
    $region7: #{tpu_custom_call.1} parent=1 // pred_check_branch
      %25 = sbr.rel (0) target = $region9
    $region8: #{tpu_custom_call.1} parent=1 // pred_region
      %27 = vsyncadd [#allocation3], 0
      %s28 = sshll.u32 %s1, 4
      %s29 = int_to_ptr.hbm [resolvable:$true] %s28
      %s30 = sshll.u32 [#allocation2], 4
      %s31 = int_to_ptr.vmem [resolvable:$true] %s30
      %36 = dma.hbm_to_vmem [thread:$0]  %s29, 256, %s31, [#allocation3], 128, 128, 8
    $region9: #{tpu_custom_call.1} parent=1 // pred_fallthru
      _
    // Predicated region
    $region10: #{tpu_custom_call.1} parent=1 // pred_check
      _
    $region11: #{tpu_custom_call.1} parent=1 // pred_check_branch
      %38 = sbr.rel (0) target = $region13
    $region12: #{tpu_custom_call.1} parent=1 // pred_region
      %40 = vsyncadd [#allocation6], 0
      %s41 = sshll.u32 %s2, 4
      %s42 = int_to_ptr.hbm [resolvable:$true] %s41
      %s43 = sshll.u32 [#allocation5], 4
      %s44 = int_to_ptr.vmem [resolvable:$true] %s43
      %49 = dma.hbm_to_vmem [thread:$0]  %s42, 256, %s44, [#allocation6], 128, 128, 8
    $region13: #{tpu_custom_call.1} parent=1 // pred_fallthru
      _
    // Predicated region
    $region14: #{tpu_custom_call.1} parent=1 // pred_check
      _
    $region15: #{tpu_custom_call.1} parent=1 // pred_check_branch
      %51 = sbr.rel (0) target = $region17
    $region16: #{tpu_custom_call.1} parent=1 // pred_region
      _
    $region17: #{tpu_custom_call.1} parent=1 // pred_fallthru
      _
    // Predicated region
    $region18: #{tpu_custom_call.1} parent=1 // pred_check
      _
    $region19: #{tpu_custom_call.1} parent=1 // pred_check_branch
      %53 = sbr.rel (0) target = $region21
    $region20: #{tpu_custom_call.1} parent=1 // pred_region
      _
    $region21: #{tpu_custom_call.1} parent=1 // pred_fallthru
      _
    // Predicated region
    $region22: #{tpu_custom_call.1} parent=1 // pred_check
      _
    $region23: #{tpu_custom_call.1} parent=1 // pred_check_branch
      %55 = sbr.rel (0) target = $region25
    $region24: #{tpu_custom_call.1} parent=1 // pred_region
      _
    $region25: #{tpu_custom_call.1} parent=1 // pred_fallthru
      _
    // Predicated region
    $region26: #{tpu_custom_call.1} parent=1 // pred_check
      _
    $region27: #{tpu_custom_call.1} parent=1 // pred_check_branch
      %57 = sbr.rel (0) target = $region29
    $region28: #{tpu_custom_call.1} parent=1 // pred_region
      _
    $region29: #{tpu_custom_call.1} parent=1 // pred_fallthru
      _
    // Predicated region
    $region30: #{tpu_custom_call.1} parent=1 // pred_check
      _
    $region31: #{tpu_custom_call.1} parent=1 // pred_check_branch
      %59 = sbr.rel (0) target = $region33
    $region32: #{tpu_custom_call.1} parent=1 // pred_region
      _
    $region33: #{tpu_custom_call.1} parent=1 // pred_fallthru
      _
    // Predicated region
    $region34: #{tpu_custom_call.1} parent=1 // pred_check
      _
    $region35: #{tpu_custom_call.1} parent=1 // pred_check_branch
      %61 = sbr.rel (0) target = $region37
    $region36: #{tpu_custom_call.1} parent=1 // pred_region
      _
    $region37: #{tpu_custom_call.1} parent=1 // pred_fallthru
      _
    // Predicated region
    $region38: #{tpu_custom_call.1} parent=1 // pred_check
      _
    $region39: #{tpu_custom_call.1} parent=1 // pred_check_branch
      %63 = sbr.rel (0) target = $region41
    $region40: #{tpu_custom_call.1} parent=1 // pred_region
      _
    $region41: #{tpu_custom_call.1} parent=1 // pred_fallthru
      _
    // Predicated region
    $region42: #{tpu_custom_call.1} parent=1 // pred_check
      _
    $region43: #{tpu_custom_call.1} parent=1 // pred_check_branch
      %65 = sbr.rel (0) target = $region45
    $region44: #{tpu_custom_call.1} parent=1 // pred_region
      %67 = dma.done [#allocation3], 256
    $region45: #{tpu_custom_call.1} parent=1 // pred_fallthru
      _
    // Predicated region
    $region46: #{tpu_custom_call.1} parent=1 // pred_check
      _
    $region47: #{tpu_custom_call.1} parent=1 // pred_check_branch
      %69 = sbr.rel (0) target = $region49
    $region48: #{tpu_custom_call.1} parent=1 // pred_region
      %71 = dma.done [#allocation6], 256
    $region49: #{tpu_custom_call.1} parent=1 // pred_fallthru
      _
    %v73 = vld [vmem:[%s0] sm:$0xff]
    %v74 = vlaneseq
    %v75 = vand.u32 %v74, 127
    %76 = vset.pattern.permute.xlu0 0
    %77 = vperm.xlu0 %76, %v73
    %v78 = vpop.permute.xlu0 %77
    %vm79 = vcmp.eq.s32.totalorder %v78, %v75
    %v80 = vsel %vm79, 1, 0
    %v81 = vcvt.s32.f32 %v80
    %v82 = vpack.c.bf16 %v81, %v81
    %v83 = vld [vmem:[%s3] sm:$0xf]
    %v84 = vld [vmem:[%s3 + $0x4] sm:$0xf]
    %v85 = vld [vmem:[%s3 + $0x8] sm:$0xf]
    %v86 = vld [vmem:[%s3 + $0xc] sm:$0xf]
    %v87 = vld [vmem:[%s3 + $0x10] sm:$0xf]
    %v88 = vld [vmem:[%s3 + $0x14] sm:$0xf]
    %v89 = vld [vmem:[%s3 + $0x18] sm:$0xf]
    %v90 = vld [vmem:[%s3 + $0x1c] sm:$0xf]
    %v99 = vunpack.c.l.b16 %v83
    %v100 = vunpack.c.l.b16 %v84
    %v101 = vunpack.c.l.b16 %v85
    %v102 = vunpack.c.l.b16 %v86
    %v103 = vunpack.c.l.b16 %v87
    %v104 = vunpack.c.l.b16 %v88
    %v105 = vunpack.c.l.b16 %v89
    %v106 = vunpack.c.l.b16 %v90
    %v107 = vpack.c.b16 %v100, %v99
    %v108 = vpack.c.b16 %v102, %v101
    %v109 = vpack.c.b16 %v104, %v103
    %v110 = vpack.c.b16 %v106, %v105
    %vm115 = vcmask 523264
    %v117 = vsel %vm115, %v82, 0
    %119 = vmatpush.bf16.msra.mxu0 0
    %120 = vmatpush.bf16.msra.mxu0 0
    %121 = vmatpush.bf16.msra.mxu0 0
    %122 = vmatpush.bf16.msra.mxu0 0
    %123 = vmatpush.bf16.msra.mxu0 %v110
    %124 = vmatpush.bf16.msra.mxu0 %v109
    %125 = vmatpush.bf16.msra.mxu0 %v108
    %126 = vmatpush.bf16.msra.mxu0 %v107
    %127 = vmatmul.bf16.gmra.mxu0 %v117
    %v128 = vpop.f32.mrf.mxu0
    %v129 = vadd.f32 0.0, %v128
    %v130 = vpop.f32.mrf.mxu0
    %131 = vdwg.mxu0
    %v132 = vld [vmem:[#allocation2] sm:$0xff]
    %v133 = vld [vmem:[#allocation5] sm:$0xff]
    %135 = vrot.lane.b32.xlu0 %v132, 32
    %v136 = vpop.permute.xlu0 %135
    %vm138 = vcmask 261120
    %v139 = vsel %vm138, %v129, %v136
    %v140 = vpack.c.bf16 %v139, %v139
    %v141 = vld [vmem:[%s4] sm:$0xf]
    %v142 = vld [vmem:[%s4 + $0x4] sm:$0xf]
    %v143 = vld [vmem:[%s4 + $0x8] sm:$0xf]
    %v144 = vld [vmem:[%s4 + $0xc] sm:$0xf]
    %v145 = vld [vmem:[%s4 + $0x10] sm:$0xf]
    %v146 = vld [vmem:[%s4 + $0x14] sm:$0xf]
    %v147 = vld [vmem:[%s4 + $0x18] sm:$0xf]
    %v148 = vld [vmem:[%s4 + $0x1c] sm:$0xf]
    %v149 = vld [vmem:[%s5] sm:$0x1]
    %v151 = vperm.slane %v149, 0
    %v161 = vunpack.c.l.b16 %v141
    %v162 = vunpack.c.l.b16 %v142
    %v163 = vunpack.c.l.b16 %v143
    %v164 = vunpack.c.l.b16 %v144
    %v165 = vunpack.c.l.b16 %v145
    %v166 = vunpack.c.l.b16 %v146
    %v167 = vunpack.c.l.b16 %v147
    %v168 = vunpack.c.l.b16 %v148
    %v169 = vpack.c.b16 %v162, %v161
    %v170 = vpack.c.b16 %v164, %v163
    %v171 = vpack.c.b16 %v166, %v165
    %v172 = vpack.c.b16 %v168, %v167
    %v178 = vsel %vm115, %v140, 0
    %180 = vmatpush.bf16.msra.mxu0 0
    %181 = vmatpush.bf16.msra.mxu0 0
    %182 = vmatpush.bf16.msra.mxu0 0
    %183 = vmatpush.bf16.msra.mxu0 0
    %184 = vmatpush.bf16.msra.mxu0 %v172
    %185 = vmatpush.bf16.msra.mxu0 %v171
    %186 = vmatpush.bf16.msra.mxu0 %v170
    %187 = vmatpush.bf16.msra.mxu0 %v169
    %188 = vmatmul.bf16.gmra.mxu0 %v178
    %v189 = vpop.f32.mrf.mxu0
    %v190 = vadd.f32 %v151, %v189
    %v191 = vpop.f32.mrf.mxu0
    %192 = vdwg.mxu0
    %v193 = vxor.u32 %v190, 2147483648
    %v194 = vmul.f32 %v193, 1.442695
    %v195 = vpow.pop %v194
    %v196 = vadd.f32 %v195, 1.0
    %v197 = vrcp.pop %v196
    %v198 = vmul.f32 %v196, %v197
    %v199 = vsub.f32 1.0, %v198
    %v200 = vmul.f32 %v197, %v199
    %v201 = vadd.f32 %v197, %v200
    %vm202 = vweird.f32 %v196
    %vm203 = vweird.f32 %v197
    %vm204 = vmor %vm202, %vm203
    %v205 = vsel %vm204, %v197, %v201
    %v206 = vand.u32 2147483647, %v196
    %vm207 = vcmp.eq.f32.partialorder %v206, 8.507059e+37
    %v208 = vand.u32 %v196, 2147483648
    %v209 = vor.u32 1.1754944e-38, %v208
    %v210 = vsel %vm207, %v209, %v205
    %v211 = vmul.f32 1.0, %v210
    %v212 = vtanh.pop %v190
    %214 = vrot.lane.b32.xlu0 %v133, 32
    %v215 = vpop.permute.xlu0 %214
    %v217 = vmul.f32 %v211, %v215
    %219 = vrot.lane.b32.xlu0 %v212, 32
    %v220 = vpop.permute.xlu0 %219
    %v222 = vmul.f32 %v211, %v220
    %224 = vrot.lane.b32.xlu0 %v222, 32
    %v225 = vpop.permute.xlu0 %224
    %v227 = vadd.f32 %v217, %v225
    %v228 = vtanh.pop %v227
    %230 = vrot.lane.b32.xlu0 %v228, 32
    %v231 = vpop.permute.xlu0 %230
    %v233 = vmul.f32 %v211, %v231
    %235 = vrot.lane.b32.xlu0 %v233, 64
    %v236 = vpop.permute.xlu0 %235
    %238 = vst.msk [vmem:[#allocation8] sm:$0xff] %vm138, %v236
    %240 = vrot.lane.b32.xlu0 %v227, 96
    %v241 = vpop.permute.xlu0 %240
    %243 = vst.msk [vmem:[#allocation10] sm:$0xff] %vm138, %v241
    %s244 = scalar_lea.vmem [#allocation2], 8
    %v245 = vld [vmem:[%s244] sm:$0xff]
    %s246 = scalar_lea.vmem [#allocation5], 8
    %v247 = vld [vmem:[%s246] sm:$0xff]
    %249 = vrot.lane.b32.xlu0 %v245, 32
    %v250 = vpop.permute.xlu0 %249
    %v252 = vsel %vm138, %v236, %v250
    %v253 = vpack.c.bf16 %v252, %v252
    %v254 = vld [vmem:[%s6] sm:$0xf]
    %v255 = vld [vmem:[%s6 + $0x4] sm:$0xf]
    %v256 = vld [vmem:[%s6 + $0x8] sm:$0xf]
    %v257 = vld [vmem:[%s6 + $0xc] sm:$0xf]
    %v258 = vld [vmem:[%s6 + $0x10] sm:$0xf]
    %v259 = vld [vmem:[%s6 + $0x14] sm:$0xf]
    %v260 = vld [vmem:[%s6 + $0x18] sm:$0xf]
    %v261 = vld [vmem:[%s6 + $0x1c] sm:$0xf]
    %v262 = vld [vmem:[%s7] sm:$0x1]
    %v264 = vperm.slane %v262, 0
    %v274 = vunpack.c.l.b16 %v254
    %v275 = vunpack.c.l.b16 %v255
    %v276 = vunpack.c.l.b16 %v256
    %v277 = vunpack.c.l.b16 %v257
    %v278 = vunpack.c.l.b16 %v258
    %v279 = vunpack.c.l.b16 %v259
    %v280 = vunpack.c.l.b16 %v260
    %v281 = vunpack.c.l.b16 %v261
    %v282 = vpack.c.b16 %v275, %v274
    %v283 = vpack.c.b16 %v277, %v276
    %v284 = vpack.c.b16 %v279, %v278
    %v285 = vpack.c.b16 %v281, %v280
    %v291 = vsel %vm115, %v253, 0
    %293 = vmatpush.bf16.msra.mxu0 0
    %294 = vmatpush.bf16.msra.mxu0 0
    %295 = vmatpush.bf16.msra.mxu0 0
    %296 = vmatpush.bf16.msra.mxu0 0
    %297 = vmatpush.bf16.msra.mxu0 %v285
    %298 = vmatpush.bf16.msra.mxu0 %v284
    %299 = vmatpush.bf16.msra.mxu0 %v283
    %300 = vmatpush.bf16.msra.mxu0 %v282
    %301 = vmatmul.bf16.gmra.mxu0 %v291
    %v302 = vpop.f32.mrf.mxu0
    %v303 = vadd.f32 %v264, %v302
    %v304 = vpop.f32.mrf.mxu0
    %305 = vdwg.mxu0
    %v306 = vxor.u32 %v303, 2147483648
    %v307 = vmul.f32 %v306, 1.442695
    %v308 = vpow.pop %v307
    %v309 = vadd.f32 %v308, 1.0
    %v310 = vrcp.pop %v309
    %v311 = vmul.f32 %v309, %v310
    %v312 = vsub.f32 1.0, %v311
    %v313 = vmul.f32 %v310, %v312
    %v314 = vadd.f32 %v310, %v313
    %vm315 = vweird.f32 %v309
    %vm316 = vweird.f32 %v310
    %vm317 = vmor %vm315, %vm316
    %v318 = vsel %vm317, %v310, %v314
    %v319 = vand.u32 2147483647, %v309
    %vm320 = vcmp.eq.f32.partialorder %v319, 8.507059e+37
    %v321 = vand.u32 %v309, 2147483648
    %v322 = vor.u32 1.1754944e-38, %v321
    %v323 = vsel %vm320, %v322, %v318
    %v324 = vmul.f32 1.0, %v323
    %v325 = vtanh.pop %v303
    %327 = vrot.lane.b32.xlu0 %v247, 32
    %v328 = vpop.permute.xlu0 %327
    %v330 = vmul.f32 %v324, %v328
    %332 = vrot.lane.b32.xlu0 %v325, 32
    %v333 = vpop.permute.xlu0 %332
    %v335 = vmul.f32 %v324, %v333
    %337 = vrot.lane.b32.xlu0 %v335, 32
    %v338 = vpop.permute.xlu0 %337
    %v340 = vadd.f32 %v330, %v338
    %v341 = vtanh.pop %v340
    %343 = vrot.lane.b32.xlu0 %v341, 32
    %v344 = vpop.permute.xlu0 %343
    %v346 = vmul.f32 %v324, %v344
    %348 = vrot.lane.b32.xlu0 %v346, 64
    %v349 = vpop.permute.xlu0 %348
    %s351 = scalar_lea.vmem [#allocation8], 8
    %352 = vst.msk [vmem:[%s351] sm:$0xff] %vm138, %v349
    %354 = vrot.lane.b32.xlu0 %v340, 96
    %v355 = vpop.permute.xlu0 %354
    %s357 = scalar_lea.vmem [#allocation10], 8
    %358 = vst.msk [vmem:[%s357] sm:$0xff] %vm138, %v355
    %v359 = vpack.c.bf16 %v346, %v346
    %v360 = vld [vmem:[%s8] sm:$0xf]
    %v361 = vld [vmem:[%s8 + $0x4] sm:$0xf]
    %v362 = vld [vmem:[%s8 + $0x8] sm:$0xf]
    %v363 = vld [vmem:[%s8 + $0xc] sm:$0xf]
    %v364 = vld [vmem:[%s9] sm:$0x1]
    %v366 = vperm.slane %v364, 0
    %369 = vrot.lane.b32.xlu0 %v359, 64
    %v370 = vpop.permute.xlu0 %369
    %v375 = vunpack.c.l.b16 %v360
    %v376 = vunpack.c.l.b16 %v361
    %v377 = vunpack.c.l.b16 %v362
    %v378 = vunpack.c.l.b16 %v363
    %v379 = vpack.c.b16 %v376, %v375
    %v380 = vpack.c.b16 %v378, %v377
    %v384 = vsel %vm138, %v370, 0
    %386 = vmatpush.bf16.msra.mxu0 0
    %387 = vmatpush.bf16.msra.mxu0 0
    %388 = vmatpush.bf16.msra.mxu0 0
    %389 = vmatpush.bf16.msra.mxu0 0
    %390 = vmatpush.bf16.msra.mxu0 0
    %391 = vmatpush.bf16.msra.mxu0 0
    %392 = vmatpush.bf16.msra.mxu0 %v380
    %393 = vmatpush.bf16.msra.mxu0 %v379
    %394 = vmatmul.bf16.gmra.mxu0 %v384
    %v395 = vpop.f32.mrf.mxu0
    %v396 = vadd.f32 %v366, %v395
    %v397 = vpop.f32.mrf.mxu0
    %398 = vdwg.mxu0
    %399 = vst [vmem:[#allocation7] sm:$0xff] %v396
    // Predicated region
    $region50: #{tpu_custom_call.1} parent=1 // pred_check
      _
    $region51: #{tpu_custom_call.1} parent=1 // pred_check_branch
      %401 = sbr.rel (0) target = $region53
    $region52: #{tpu_custom_call.1} parent=1 // pred_region
      %403 = vsyncadd [#allocation4], 0
      %s405 = sshll.u32 [#allocation7], 4
      %s406 = int_to_ptr.vmem [resolvable:$true] %s405
      %s407 = sshll.u32 %s10, 4
      %s408 = int_to_ptr.hbm [resolvable:$true] %s407
      %410 = dma.vmem_to_hbm [thread:$0]  %s406, 128, %s408, [#allocation4]
    $region53: #{tpu_custom_call.1} parent=1 // pred_fallthru
      _
    // Predicated region
    $region54: #{tpu_custom_call.1} parent=1 // pred_check
      _
    $region55: #{tpu_custom_call.1} parent=1 // pred_check_branch
      %412 = sbr.rel (0) target = $region57
    $region56: #{tpu_custom_call.1} parent=1 // pred_region
      %414 = vsyncadd [#allocation9], 0
      %s415 = sshll.u32 [#allocation8], 4
      %s416 = int_to_ptr.vmem [resolvable:$true] %s415
      %s417 = sshll.u32 %s11, 4
      %s418 = int_to_ptr.hbm [resolvable:$true] %s417
      %423 = dma.vmem_to_hbm [thread:$0]  %s416, 256, %s418, [#allocation9], 128, 128, 8
    $region57: #{tpu_custom_call.1} parent=1 // pred_fallthru
      _
    // Predicated region
    $region58: #{tpu_custom_call.1} parent=1 // pred_check
      _
    $region59: #{tpu_custom_call.1} parent=1 // pred_check_branch
      %425 = sbr.rel (0) target = $region61
    $region60: #{tpu_custom_call.1} parent=1 // pred_region
      %427 = vsyncadd [#allocation9], 0
      %s428 = sshll.u32 [#allocation10], 4
      %s429 = int_to_ptr.vmem [resolvable:$true] %s428
      %s430 = sshll.u32 %s12, 4
      %s431 = int_to_ptr.hbm [resolvable:$true] %s430
      %436 = dma.vmem_to_hbm [thread:$0]  %s429, 256, %s431, [#allocation9], 128, 128, 8
    $region61: #{tpu_custom_call.1} parent=1 // pred_fallthru
      _
    // Predicated region
    $region62: #{tpu_custom_call.1} parent=1 // pred_check
      _
    $region63: #{tpu_custom_call.1} parent=1 // pred_check_branch
      %438 = sbr.rel (0) target = $region65
    $region64: #{tpu_custom_call.1} parent=1 // pred_region
      %440 = dma.done [#allocation4], 128
    $region65: #{tpu_custom_call.1} parent=1 // pred_fallthru
      _
    // Predicated region
    $region66: #{tpu_custom_call.1} parent=1 // pred_check
      _
    $region67: #{tpu_custom_call.1} parent=1 // pred_check_branch
      %442 = sbr.rel (0) target = $region69
    $region68: #{tpu_custom_call.1} parent=1 // pred_region
      %444 = dma.done [#allocation9], 256
    $region69: #{tpu_custom_call.1} parent=1 // pred_fallthru
      _
    // Predicated region
    $region70: #{tpu_custom_call.1} parent=1 // pred_check
      _
    $region71: #{tpu_custom_call.1} parent=1 // pred_check_branch
      %446 = sbr.rel (0) target = $region73
    $region72: #{tpu_custom_call.1} parent=1 // pred_region
      %448 = dma.done [#allocation9], 256
    $region73: #{tpu_custom_call.1} parent=1 // pred_fallthru
      _
    %449 = vsyncpa [#allocation3], 1
    %450 = vsyncpa [#allocation6], 1
    %451 = vsyncpa [#allocation4], 1
    %452 = vsyncpa [#allocation9], 1

</llo_original>
